<compile_context>
chip_gen: v5e
topology: v5e:2x2
jax: 0.10.0
libtpu: 0.0.40
codegen_flags: <defaults>
</compile_context>

<pallas_src>
import jax
import jax.numpy as jnp
from jax.experimental import pallas as pl
from jax.experimental.pallas import tpu as pltpu


def _se_kernel(x_ref, w1_ref, w2_ref, o_ref):
    # x_ref / o_ref: (Bt, C, HW) slab; w1_ref: (C, Cr); w2_ref: (Cr, C).
    x = x_ref[...]                                     # native dtype, (Bt, C, HW)
    hw = x.shape[-1]

    # Global average pool over the lane (HW) axis with exact f32 accumulation.
    pooled = jnp.sum(x.astype(jnp.float32), axis=-1) * (1.0 / hw)        # (Bt, C)

    # Linear(C -> C//r, no bias) + ReLU   (MXU, f32 accumulate, full precision)
    h = jnp.maximum(
        jnp.dot(pooled, w1_ref[...],
                precision=jax.lax.Precision.HIGHEST,
                preferred_element_type=jnp.float32),
        0.0)                                                             # (Bt, Cr)

    # Linear(C//r -> C, no bias) + Sigmoid
    g = jax.nn.sigmoid(
        jnp.dot(h, w2_ref[...],
                precision=jax.lax.Precision.HIGHEST,
                preferred_element_type=jnp.float32))                     # (Bt, C)

    # Per-channel gate broadcast across the lane (HW) axis, native dtype.
    o_ref[...] = (x * g.astype(x.dtype)[:, :, None]).astype(o_ref.dtype)


def _pick_batch_block(batch, per_sample_bytes):
    """Largest divisor of `batch` whose slab is ~<=2 MiB, fits the VMEM budget,
    and leaves a grid of >= 2 steps (so both v7x TensorCores get work)."""
    slab_target = 2 << 20   # ~1-2 MiB per DMA -> 85%+ of HBM roofline
    vmem_budget = 24 << 20  # ~4*slab live (dbl-buffered in + out) stays < 32 MiB scoped
    bt_cap = min(batch,
                 max(1, slab_target // per_sample_bytes),
                 max(1, vmem_budget // (4 * per_sample_bytes)))
    if batch >= 2:
        bt_cap = max(1, min(bt_cap, batch // 2))
    return max(d for d in range(1, int(bt_cap) + 1) if batch % d == 0)


def squeeze_excitation(x, w1, w2):
    """x: (B, C, H, W) NCHW; w1: (C//r, C); w2: (C, C//r) — PyTorch Linear layout."""
    B, C, H, W = x.shape
    Cr = w1.shape[0]
    assert w1.shape == (Cr, C) and w2.shape == (C, Cr)
    hw = H * W

    # Free reshape of contiguous trailing dims; NCHW stays NCHW in HBM.
    x3 = x.reshape(B, C, hw)
    # Pre-transpose the tiny FC weights once so the kernel does row-major matmuls.
    w1_t = jnp.transpose(w1)          # (C, Cr)
    w2_t = jnp.transpose(w2)          # (Cr, C)

    itemsize = jnp.dtype(x.dtype).itemsize
    per_sample = C * hw * itemsize
    bt = _pick_batch_block(B, per_sample)
    grid = (B // bt,)

    # Explicit scoped-VMEM grant: at least the ~4*slab live footprint, >= 32 MiB
    # (so v5e's 16 MiB default doesn't shrink the pipeline), capped below v7x's
    # 64 MiB physical per-TC VMEM.
    weight_bytes = 2 * C * Cr * jnp.dtype(w1.dtype).itemsize
    live_bytes = 4 * bt * per_sample + 4 * weight_bytes + (1 << 20)
    vmem_limit = int(min(max(32 << 20, live_bytes), 56 << 20))

    out3 = pl.pallas_call(
        _se_kernel,
        out_shape=jax.ShapeDtypeStruct((B, C, hw), x.dtype),
        grid=grid,
        in_specs=[
            # Bt samples per step, (8,128)-legal since (C, hw) are full dims.
            pl.BlockSpec((bt, C, hw), lambda b: (b, 0, 0)),
            # Weights: full-array blocks, same index every step -> VMEM-resident.
            pl.BlockSpec((C, Cr), lambda b: (0, 0)),
            pl.BlockSpec((Cr, C), lambda b: (0, 0)),
        ],
        out_specs=pl.BlockSpec((bt, C, hw), lambda b: (b, 0, 0)),
        compiler_params=pltpu.CompilerParams(
            dimension_semantics=("parallel",),
            vmem_limit_bytes=vmem_limit,
        ),
    )(x3, w1_t, w2_t)

    return out3.reshape(B, C, H, W)


def _reference(x, w1, w2):
    """Plain-JAX reference mirroring the PyTorch module (exact f32 matmuls)."""
    pooled = jnp.mean(x, axis=(2, 3))                                    # (B, C)
    h = jnp.maximum(
        jnp.dot(pooled, w1.T, precision=jax.lax.Precision.HIGHEST), 0.0)  # (B, C//r)
    g = jax.nn.sigmoid(
        jnp.dot(h, w2.T, precision=jax.lax.Precision.HIGHEST))            # (B, C)
    return x * g[:, :, None, None]


if __name__ == "__main__":
    B, C, H, W = 2, 16, 16, 16
    r = 8
    Cr = C // r

    key = jax.random.PRNGKey(0)
    kx, k1, k2 = jax.random.split(key, 3)

    x = jax.random.normal(kx, (B, C, H, W), dtype=jnp.float32)
    # Deterministic synthetic weights (PyTorch Linear layout: (out, in)).
    w1 = jax.random.normal(k1, (Cr, C), dtype=jnp.float32) * 0.1
    w2 = jax.random.normal(k2, (C, Cr), dtype=jnp.float32) * 0.1

    out = squeeze_excitation(x, w1, w2)
    out = jax.block_until_ready(out)

    ref = _reference(x, w1, w2)
    assert out.shape == (B, C, H, W)
    assert jnp.allclose(out, ref, atol=1e-5, rtol=1e-5), (
        f"mismatch vs reference, max abs err = {jnp.max(jnp.abs(out - ref))}")

    print("KERNEL_OK")
</pallas_src>

<mosaic_0001>
module attributes {stable_mosaic.version = 11 : i64} {
  func.func @_se_kernel(%arg0: i32, %arg1: memref<1x16x256xf32, #tpu.memory_space<vmem>>, %arg2: memref<16x2xf32, #tpu.memory_space<vmem>>, %arg3: memref<2x16xf32, #tpu.memory_space<vmem>>, %arg4: memref<1x16x256xf32, #tpu.memory_space<vmem>>) attributes {dimension_semantics = [#tpu.dimension_semantics<parallel>], iteration_bounds = array<i64: 2>, scalar_prefetch = 0 : i64, scratch_operands = 0 : i64, tpu.core_type = #tpu.core_type<tc>, window_params = [{transform_indices = @transform_0, window_bounds = array<i64: 1, 16, 256>}, {pipeline_mode = #tpu.pipeline_mode<synchronous>, transform_indices = @transform_1, window_bounds = array<i64: 16, 2>}, {pipeline_mode = #tpu.pipeline_mode<synchronous>, transform_indices = @transform_2, window_bounds = array<i64: 2, 16>}, {transform_indices = @transform_3, window_bounds = array<i64: 1, 16, 256>}]} {
    %c0 = arith.constant 0 : index
    %c0_0 = arith.constant 0 : index
    %c0_1 = arith.constant 0 : index
    %0 = vector.load %arg1[%c0, %c0_0, %c0_1] : memref<1x16x256xf32, #tpu.memory_space<vmem>>, vector<1x16x256xf32>
    %cst = arith.constant dense<0.000000e+00> : vector<1x16xf32>
    %1 = vector.multi_reduction <add>, %0, %cst [2] : vector<1x16x256xf32> to vector<1x16xf32>
    %cst_2 = arith.constant 3.906250e-03 : f32
    %2 = vector.broadcast %cst_2 : f32 to vector<1x16xf32>
    %3 = arith.mulf %1, %2 : vector<1x16xf32>
    %c0_3 = arith.constant 0 : index
    %c0_4 = arith.constant 0 : index
    %4 = vector.load %arg2[%c0_3, %c0_4] : memref<16x2xf32, #tpu.memory_space<vmem>>, vector<16x2xf32>
    %cst_5 = arith.constant dense<0.000000e+00> : vector<1x2xf32>
    %5 = tpu.matmul %3, %4, %cst_5 {dimension_numbers = #tpu.dot_dimension_numbers<[1], [0], [0], [1], [0, 0, 1, 1], [], []>, precision = #tpu.contract_precision<fp32>} : vector<1x16xf32>, vector<16x2xf32>, vector<1x2xf32> -> vector<1x2xf32>
    %cst_6 = arith.constant 0.000000e+00 : f32
    %6 = vector.broadcast %cst_6 : f32 to vector<1x2xf32>
    %7 = arith.maximumf %5, %6 : vector<1x2xf32>
    %c0_7 = arith.constant 0 : index
    %c0_8 = arith.constant 0 : index
    %8 = vector.load %arg3[%c0_7, %c0_8] : memref<2x16xf32, #tpu.memory_space<vmem>>, vector<2x16xf32>
    %cst_9 = arith.constant dense<0.000000e+00> : vector<1x16xf32>
    %9 = tpu.matmul %7, %8, %cst_9 {dimension_numbers = #tpu.dot_dimension_numbers<[1], [0], [0], [1], [0, 0, 1, 1], [], []>, precision = #tpu.contract_precision<fp32>} : vector<1x2xf32>, vector<2x16xf32>, vector<1x16xf32> -> vector<1x16xf32>
    %10 = arith.negf %9 : vector<1x16xf32>
    %11 = math.exp %10 : vector<1x16xf32>
    %cst_10 = arith.constant 1.000000e+00 : f32
    %12 = vector.broadcast %cst_10 : f32 to vector<1x16xf32>
    %13 = arith.addf %12, %11 : vector<1x16xf32>
    %14 = arith.divf %12, %13 : vector<1x16xf32>
    %15 = vector.shape_cast %14 : vector<1x16xf32> to vector<1x16x1xf32>
    %16 = vector.broadcast %15 : vector<1x16x1xf32> to vector<1x16x256xf32>
    %17 = arith.mulf %0, %16 : vector<1x16x256xf32>
    %c0_11 = arith.constant 0 : index
    %c0_12 = arith.constant 0 : index
    %c0_13 = arith.constant 0 : index
    %18 = vector.load %arg4[%c0_11, %c0_12, %c0_13] : memref<1x16x256xf32, #tpu.memory_space<vmem>>, vector<1x16x256xf32>
    tpu.vector_store %arg4[%c0_11, %c0_12, %c0_13], %17 {strides = array<i32>} : memref<1x16x256xf32, #tpu.memory_space<vmem>>, vector<1x16x256xf32>,
    return
  }
  func.func @transform_0(%arg0: i32) -> (i32, i32, i32) {
    %c0_i32 = arith.constant 0 : i32
    %c0_i32_0 = arith.constant 0 : i32
    %c0_i32_1 = arith.constant 0 : i32
    return %arg0, %c0_i32, %c0_i32_0 : i32, i32, i32
  }
  func.func @transform_1(%arg0: i32) -> (i32, i32) {
    %c0_i32 = arith.constant 0 : i32
    %c0_i32_0 = arith.constant 0 : i32
    %c0_i32_1 = arith.constant 0 : i32
    return %c0_i32, %c0_i32_0 : i32, i32
  }
  func.func @transform_2(%arg0: i32) -> (i32, i32) {
    %c0_i32 = arith.constant 0 : i32
    %c0_i32_0 = arith.constant 0 : i32
    %c0_i32_1 = arith.constant 0 : i32
    return %c0_i32, %c0_i32_0 : i32, i32
  }
  func.func @transform_3(%arg0: i32) -> (i32, i32, i32) {
    %c0_i32 = arith.constant 0 : i32
    %c0_i32_0 = arith.constant 0 : i32
    %c0_i32_1 = arith.constant 0 : i32
    return %arg0, %c0_i32, %c0_i32_0 : i32, i32, i32
  }
}

</mosaic_0001>

<llo_original>
// kernel: tpu_custom_call.1
$region0: #{tpu_custom_call.1}
  #allocation0 [shape = 'u32[]', space=smem, size = 0x4, offset = 0x4, fixed_abs, tag = 'smem constant byte address 0x4 - core index']
  #allocation1 [shape = 'u32[72,128]{1,0:T(1,128)}', space=vmem, size = 0x9000, scoped, tag = 'internal scratch']
  %s0 = inlined_call_operand.hbm [shape: f32[2,16,256], index: 0, kind: input, shape index: {}]
  %s1 = inlined_call_operand.vmem [shape: f32[16,2], index: 1, kind: input, shape index: {}]
  %s2 = inlined_call_operand.vmem [shape: f32[2,16], index: 2, kind: input, shape index: {}]
  %s3 = inlined_call_operand.hbm [shape: f32[2,16,256], index: 3, kind: output, shape index: {}]
  %s4 = sld [smem:[#allocation0]]
  $region49: #{tpu_custom_call.1} parent=0
    _
  %s6 = ssub.s32 1, %s4
  %s7 = scalar_select 0, %s6, %s4
  $region1: #{tpu_custom_call.1} parent=0
    #allocation2 [shape = 'u8[32768]{0}', space=vmem, size = 0x8000, scoped, tag = 'input window, operand 0']
    #allocation3 [shape = 's32[2]{0}', space=sflag, size = 0x8, scoped, tag = 'scoped memory for tpu_custom_call.1']
    #allocation4 [shape = 's32[2]{0}', space=sflag, size = 0x8, scoped, tag = 'scoped memory for tpu_custom_call.1']
    #allocation5 [shape = 'u8[32768]{0}', space=vmem, size = 0x8000, scoped, tag = 'output window, operand 0']
    %8 = vsyncpa [#allocation3], 0
    %s9 = scalar_lea.sflag [#allocation3], 1
    %10 = vsyncpa %s9, 0
    %11 = vsyncpa [#allocation4], 0
    %s12 = scalar_lea.sflag [#allocation4], 1
    %13 = vsyncpa %s12, 0
    loop: start=0, step=1, limit=4
    $region2: #{tpu_custom_call.1} parent=1 // loop_pre_header
      _
    $region3: #{tpu_custom_call.1} parent=1 // loop_header
      %s15 = sphi 0, %s19
      %p16 = scmp.ge.s32.totalorder %s15, 4
      %s25 = sphi 0, %s27
      %s28 = sphi 0, %s25
      %s29 = sphi 0, %s28
      %s45 = sphi 0, %s29
      %s49 = sphi 0, %s49
      %s51 = sphi 0, %s49
      %s52 = sphi 0, %s51
      %s66 = sphi 0, %s52
      %s70 = sphi 0, %s70
      %s72 = sphi 0, %s70
      %s73 = sphi 0, %s72
      %s87 = sphi 0, %s73
      %s93 = sphi 0, %s95
      %s96 = sphi 0, %s93
      %s97 = sphi 0, %s96
      %s113 = sphi 0, %s97
    $region4: #{tpu_custom_call.1} parent=1 // loop_header_branch
      %18 = sbr.rel (%p16) target = $region8
    $region5: #{tpu_custom_call.1} parent=1 // loop_body
      %s20 = ssub.s32 %s15, 1
      %s21 = ssub.s32 %s15, 2
      %s22 = sadd.s32 %s15, 1
      %s23 = ssub.s32 %s15, %s22
      %p24 = scmp.eq.s32.totalorder %s23, 0
      %s26 = sadd.s32 %s25, 1
      %s27 = scalar_select %p24, %s25, %s26
      %p30 = pneg %p24
      %p31 = scmp.eq.s32.totalorder %s15, 1
      %p32 = por %p30, %p31
      %p33 = scmp.ne.s32.totalorder %s25, %s28
      %p34 = scmp.eq.s32.totalorder %s15, 0
      %p35 = por %p33, %p34
      %p36 = scmp.ne.s32.totalorder %s25, %s28
      %p37 = scmp.eq.s32.totalorder %s20, 1
      %p38 = por %p36, %p37
      %p39 = scmp.ne.s32.totalorder %s28, %s29
      %p40 = scmp.eq.s32.totalorder %s20, 0
      %p41 = por %p39, %p40
      %p42 = scmp.ne.s32.totalorder %s28, %s29
      %p43 = scmp.eq.s32.totalorder %s21, 1
      %p44 = por %p42, %p43
      %p46 = scmp.ne.s32.totalorder %s29, %s45
      %p47 = scmp.eq.s32.totalorder %s21, 0
      %p48 = por %p46, %p47
      %s50 = sadd.s32 %s49, 1
      %p53 = scmp.eq.s32.totalorder %s15, 1
      %p54 = scmp.ne.s32.totalorder %s49, %s51
      %p55 = scmp.eq.s32.totalorder %s15, 0
      %p56 = por %p54, %p55
      %p57 = scmp.ne.s32.totalorder %s49, %s51
      %p58 = scmp.eq.s32.totalorder %s20, 1
      %p59 = por %p57, %p58
      %p60 = scmp.ne.s32.totalorder %s51, %s52
      %p61 = scmp.eq.s32.totalorder %s20, 0
      %p62 = por %p60, %p61
      %p63 = scmp.ne.s32.totalorder %s51, %s52
      %p64 = scmp.eq.s32.totalorder %s21, 1
      %p65 = por %p63, %p64
      %p67 = scmp.ne.s32.totalorder %s52, %s66
      %p68 = scmp.eq.s32.totalorder %s21, 0
      %p69 = por %p67, %p68
      %s71 = sadd.s32 %s70, 1
      %p74 = scmp.eq.s32.totalorder %s15, 1
      %p75 = scmp.ne.s32.totalorder %s70, %s72
      %p76 = scmp.eq.s32.totalorder %s15, 0
      %p77 = por %p75, %p76
      %p78 = scmp.ne.s32.totalorder %s70, %s72
      %p79 = scmp.eq.s32.totalorder %s20, 1
      %p80 = por %p78, %p79
      %p81 = scmp.ne.s32.totalorder %s72, %s73
      %p82 = scmp.eq.s32.totalorder %s20, 0
      %p83 = por %p81, %p82
      %p84 = scmp.ne.s32.totalorder %s72, %s73
      %p85 = scmp.eq.s32.totalorder %s21, 1
      %p86 = por %p84, %p85
      %p88 = scmp.ne.s32.totalorder %s73, %s87
      %p89 = scmp.eq.s32.totalorder %s21, 0
      %p90 = por %p88, %p89
      %s91 = ssub.s32 %s15, %s22
      %p92 = scmp.eq.s32.totalorder %s91, 0
      %s94 = sadd.s32 %s93, 1
      %s95 = scalar_select %p92, %s93, %s94
      %p98 = pneg %p92
      %p99 = scmp.eq.s32.totalorder %s15, 1
      %p100 = por %p98, %p99
      %p101 = scmp.ne.s32.totalorder %s93, %s96
      %p102 = scmp.eq.s32.totalorder %s15, 0
      %p103 = por %p101, %p102
      %p104 = scmp.ne.s32.totalorder %s93, %s96
      %p105 = scmp.eq.s32.totalorder %s20, 1
      %p106 = por %p104, %p105
      %p107 = scmp.ne.s32.totalorder %s96, %s97
      %p108 = scmp.eq.s32.totalorder %s20, 0
      %p109 = por %p107, %p108
      %p110 = scmp.ne.s32.totalorder %s96, %s97
      %p111 = scmp.eq.s32.totalorder %s21, 1
      %p112 = por %p110, %p111
      %p114 = scmp.ne.s32.totalorder %s97, %s113
      %p115 = scmp.eq.s32.totalorder %s21, 0
      %p116 = por %p114, %p115
      %p117 = scmp.le.s32.totalorder 1, %s15
      %p118 = scmp.lt.s32.totalorder %s15, 3
      %p119 = pnand %p117, %p118
      %p120 = pneg %p119
      // Predicated region
      $region9: #{tpu_custom_call.1} parent=5 // pred_check
        _
      $region10: #{tpu_custom_call.1} parent=5 // pred_check_branch
        %122 = sbr.rel (%p119) target = $region12
      $region11: #{tpu_custom_call.1} parent=5 // pred_region
        %s123 = ssub.s32 %s15, 1
        // Predicated region
        $region13: #{tpu_custom_call.1} parent=11 // pred_check
          %p124 = pneg %p62
        $region14: #{tpu_custom_call.1} parent=11 // pred_check_branch
          %126 = sbr.rel (%p124) target = $region16
        $region15: #{tpu_custom_call.1} parent=11 // pred_region
          _
        $region16: #{tpu_custom_call.1} parent=11 // pred_fallthru
          _
        // Predicated region
        $region17: #{tpu_custom_call.1} parent=11 // pred_check
          %p127 = pneg %p83
        $region18: #{tpu_custom_call.1} parent=11 // pred_check_branch
          %129 = sbr.rel (%p127) target = $region20
        $region19: #{tpu_custom_call.1} parent=11 // pred_region
          _
        $region20: #{tpu_custom_call.1} parent=11 // pred_fallthru
          _
      $region12: #{tpu_custom_call.1} parent=5 // pred_fallthru
        _
      %p130 = scmp.lt.s32.totalorder %s15, 2
      // Predicated region
      $region21: #{tpu_custom_call.1} parent=5 // pred_check
        %p131 = pneg %p130
      $region22: #{tpu_custom_call.1} parent=5 // pred_check_branch
        %133 = sbr.rel (%p131) target = $region24
      $region23: #{tpu_custom_call.1} parent=5 // pred_region
        // Predicated region
        $region25: #{tpu_custom_call.1} parent=23 // pred_check
          %p134 = pneg %p35
        $region26: #{tpu_custom_call.1} parent=23 // pred_check_branch
          %136 = sbr.rel (%p134) target = $region28
        $region27: #{tpu_custom_call.1} parent=23 // pred_region
          %s137 = sand.u32 %s25, 1
          %s138 = scalar_lea.sflag [#allocation3], %s137
          %s139 = sand.u32 %s25, 1
          %s140 = smul.addr %s139, 32
          %s141 = scalar_lea.vmem [#allocation2], %s140
          %143 = vsyncadd %s138, 0
          %s144 = smul.addr %s15, 4
          %s145 = smul.addr %s144, 8
          %s146 = scalar_lea.hbm %s0, %s145
          %s147 = sshll.u32 %s146, 4
          %s148 = int_to_ptr.hbm [resolvable:$true] %s147
          %s149 = sshll.u32 %s141, 4
          %s150 = int_to_ptr.vmem [resolvable:$true] %s149
          %155 = dma.hbm_to_vmem [thread:$0]  %s148, 512, %s150, %s138, 256, 256, 16
        $region28: #{tpu_custom_call.1} parent=23 // pred_fallthru
          _
      $region24: #{tpu_custom_call.1} parent=5 // pred_fallthru
        _
      %p156 = scmp.le.s32.totalorder 1, %s15
      %p157 = scmp.lt.s32.totalorder %s15, 3
      %p158 = pnand %p156, %p157
      %p159 = pneg %p158
      // Predicated region
      $region29: #{tpu_custom_call.1} parent=5 // pred_check
        _
      $region30: #{tpu_custom_call.1} parent=5 // pred_check_branch
        %161 = sbr.rel (%p158) target = $region32
      $region31: #{tpu_custom_call.1} parent=5 // pred_region
        %s162 = ssub.s32 %s15, 1
        %s163 = sand.u32 %s28, 1
        %s164 = scalar_lea.sflag [#allocation3], %s163
        %s165 = sand.u32 %s28, 1
        %s166 = smul.addr %s165, 32
        %s167 = scalar_lea.vmem [#allocation2], %s166
        // Predicated region
        $region33: #{tpu_custom_call.1} parent=31 // pred_check
          %p168 = pneg %p41
        $region34: #{tpu_custom_call.1} parent=31 // pred_check_branch
          %170 = sbr.rel (%p168) target = $region36
        $region35: #{tpu_custom_call.1} parent=31 // pred_region
          %172 = dma.done %s164, 512
        $region36: #{tpu_custom_call.1} parent=31 // pred_fallthru
          _
        %s173 = sand.u32 %s28, 1
        %s174 = scalar_lea.sflag [#allocation3], %s173
        %s175 = sand.u32 %s28, 1
        %s176 = smul.addr %s175, 32
        %s177 = scalar_lea.vmem [#allocation2], %s176
        %p178 = pneg %p41
        %p179 = pneg %p38
        %p180 = pneg %p62
        %p181 = pneg %p59
        %p182 = pneg %p83
        %p183 = pneg %p80
        %p184 = pneg %p109
        %p185 = pneg %p106
        %s186 = sand.u32 %s96, 1
        %s187 = scalar_lea.sflag [#allocation4], %s186
        %s188 = sand.u32 %s96, 1
        %s189 = smul.addr %s188, 32
        %s190 = scalar_lea.vmem [#allocation5], %s189
        %v191 = vld [vmem:[%s167] sm:$0xff]
        %v192 = vld [vmem:[%s167 + $0x8] sm:$0xff]
        %v193 = vld [vmem:[%s167 + $0x10] sm:$0xff]
        %v194 = vld [vmem:[%s167 + $0x18] sm:$0xff]
        %v195 = vadd.f32 %v191, %v192
        %196 = vadd.xlane.f32.xlu0 %v195
        %v197 = vpop.xlane.xlu0 %196
        %v198 = vadd.f32 %v193, %v194
        %199 = vadd.xlane.f32.xlu0 %v198
        %v200 = vpop.xlane.xlu0 %199
        %v201 = vmul.f32 %v197, 0.00390625
        %v202 = vmul.f32 %v200, 0.00390625
        %v203 = vld [vmem:[%s1] sm:$0xff]
        %v204 = vld [vmem:[%s1 + $0x8] sm:$0xff]
        %v207 = vlaneseq
        %v208 = vand.u32 %v207, 127
        %v209 = vperm.slane %v201, %v208
        %v210 = vadd.s32 %v208, 4294967288
        %v211 = vperm.slane %v202, %v210
        %vm212 = vcmask 130112
        %v213 = vsel %vm212, %v211, %v209
        %vm214 = vcmask 130048
        %v215 = vsel %vm214, %v213, 0
        %217 = vmatpush.msra.mxu0 0.0
        %218 = vmatpush.msra.mxu0 0.0
        %219 = vmatpush.msra.mxu0 0.0
        %220 = vmatpush.msra.mxu0 0.0
        %221 = vmatpush.msra.mxu0 0.0
        %222 = vmatpush.msra.mxu0 0.0
        %223 = vmatpush.msra.mxu0 0.0
        %224 = vmatpush.msra.mxu0 0.0
        %225 = vmatpush.msra.mxu0 0.0
        %226 = vmatpush.msra.mxu0 0.0
        %227 = vmatpush.msra.mxu0 0.0
        %228 = vmatpush.msra.mxu0 0.0
        %229 = vmatpush.msra.mxu0 0.0
        %230 = vmatpush.msra.mxu0 0.0
        %v231 = vand.u32 %v204, 4294901760
        %232 = vmatpush.msra.mxu0 %v231
        %v233 = vand.u32 %v203, 4294901760
        %234 = vmatpush.msra.mxu0 %v233
        %v235 = vand.u32 %v215, 4294901760
        %v236 = vsub.f32 %v215, %v235
        %v237 = vand.u32 %v236, 4294901760
        %v238 = vsub.f32 %v236, %v237
        %v239 = vand.u32 %v238, 4294901760
        %240 = vmatmul.f32.gmra.mxu0 %v239
        %v241 = vpop.f32.mrf.mxu0
        %v242 = vadd.f32 0.0, %v241
        %243 = vdwg.mxu0
        %244 = vmatpush.msra.mxu0 0.0
        %245 = vmatpush.msra.mxu0 0.0
        %246 = vmatpush.msra.mxu0 0.0
        %247 = vmatpush.msra.mxu0 0.0
        %248 = vmatpush.msra.mxu0 0.0
        %249 = vmatpush.msra.mxu0 0.0
        %250 = vmatpush.msra.mxu0 0.0
        %251 = vmatpush.msra.mxu0 0.0
        %252 = vmatpush.msra.mxu0 0.0
        %253 = vmatpush.msra.mxu0 0.0
        %254 = vmatpush.msra.mxu0 0.0
        %255 = vmatpush.msra.mxu0 0.0
        %256 = vmatpush.msra.mxu0 0.0
        %257 = vmatpush.msra.mxu0 0.0
        %v258 = vand.u32 %v204, 4294901760
        %v259 = vsub.f32 %v204, %v258
        %v260 = vand.u32 %v259, 4294901760
        %v261 = vsub.f32 %v259, %v260
        %v262 = vand.u32 %v261, 4294901760
        %263 = vmatpush.msra.mxu0 %v262
        %v264 = vand.u32 %v203, 4294901760
        %v265 = vsub.f32 %v203, %v264
        %v266 = vand.u32 %v265, 4294901760
        %v267 = vsub.f32 %v265, %v266
        %v268 = vand.u32 %v267, 4294901760
        %269 = vmatpush.msra.mxu0 %v268
        %v270 = vand.u32 %v215, 4294901760
        %271 = vmatmul.f32.gmra.mxu0 %v270
        %v272 = vpop.f32.mrf.mxu0
        %v273 = vadd.f32 %v242, %v272
        %274 = vdwg.mxu0
        %275 = vmatpush.msra.mxu0 0.0
        %276 = vmatpush.msra.mxu0 0.0
        %277 = vmatpush.msra.mxu0 0.0
        %278 = vmatpush.msra.mxu0 0.0
        %279 = vmatpush.msra.mxu0 0.0
        %280 = vmatpush.msra.mxu0 0.0
        %281 = vmatpush.msra.mxu0 0.0
        %282 = vmatpush.msra.mxu0 0.0
        %283 = vmatpush.msra.mxu0 0.0
        %284 = vmatpush.msra.mxu0 0.0
        %285 = vmatpush.msra.mxu0 0.0
        %286 = vmatpush.msra.mxu0 0.0
        %287 = vmatpush.msra.mxu0 0.0
        %288 = vmatpush.msra.mxu0 0.0
        %v289 = vand.u32 %v204, 4294901760
        %v290 = vsub.f32 %v204, %v289
        %291 = vmatpush.msra.mxu0 %v290
        %v292 = vand.u32 %v203, 4294901760
        %v293 = vsub.f32 %v203, %v292
        %294 = vmatpush.msra.mxu0 %v293
        %v295 = vand.u32 %v215, 4294901760
        %v296 = vsub.f32 %v215, %v295
        %297 = vmatmul.f32.gmra.mxu0 %v296
        %v298 = vpop.f32.mrf.mxu0
        %v299 = vadd.f32 %v273, %v298
        %300 = vdwg.mxu0
        %301 = vmatpush.msra.mxu0 0.0
        %302 = vmatpush.msra.mxu0 0.0
        %303 = vmatpush.msra.mxu0 0.0
        %304 = vmatpush.msra.mxu0 0.0
        %305 = vmatpush.msra.mxu0 0.0
        %306 = vmatpush.msra.mxu0 0.0
        %307 = vmatpush.msra.mxu0 0.0
        %308 = vmatpush.msra.mxu0 0.0
        %309 = vmatpush.msra.mxu0 0.0
        %310 = vmatpush.msra.mxu0 0.0
        %311 = vmatpush.msra.mxu0 0.0
        %312 = vmatpush.msra.mxu0 0.0
        %313 = vmatpush.msra.mxu0 0.0
        %314 = vmatpush.msra.mxu0 0.0
        %v315 = vand.u32 %v204, 4294901760
        %316 = vmatpush.msra.mxu0 %v315
        %v317 = vand.u32 %v203, 4294901760
        %318 = vmatpush.msra.mxu0 %v317
        %v319 = vand.u32 %v215, 4294901760
        %v320 = vsub.f32 %v215, %v319
        %v321 = vand.u32 %v320, 4294901760
        %322 = vmatmul.f32.gmra.mxu0 %v321
        %v323 = vpop.f32.mrf.mxu0
        %v324 = vadd.f32 %v299, %v323
        %325 = vdwg.mxu0
        %326 = vmatpush.msra.mxu0 0.0
        %327 = vmatpush.msra.mxu0 0.0
        %328 = vmatpush.msra.mxu0 0.0
        %329 = vmatpush.msra.mxu0 0.0
        %330 = vmatpush.msra.mxu0 0.0
        %331 = vmatpush.msra.mxu0 0.0
        %332 = vmatpush.msra.mxu0 0.0
        %333 = vmatpush.msra.mxu0 0.0
        %334 = vmatpush.msra.mxu0 0.0
        %335 = vmatpush.msra.mxu0 0.0
        %336 = vmatpush.msra.mxu0 0.0
        %337 = vmatpush.msra.mxu0 0.0
        %338 = vmatpush.msra.mxu0 0.0
        %339 = vmatpush.msra.mxu0 0.0
        %v340 = vand.u32 %v204, 4294901760
        %v341 = vsub.f32 %v204, %v340
        %v342 = vand.u32 %v341, 4294901760
        %343 = vmatpush.msra.mxu0 %v342
        %v344 = vand.u32 %v203, 4294901760
        %v345 = vsub.f32 %v203, %v344
        %v346 = vand.u32 %v345, 4294901760
        %347 = vmatpush.msra.mxu0 %v346
        %v348 = vand.u32 %v215, 4294901760
        %349 = vmatmul.f32.gmra.mxu0 %v348
        %v350 = vpop.f32.mrf.mxu0
        %v351 = vadd.f32 %v324, %v350
        %352 = vdwg.mxu0
        %353 = vmatpush.msra.mxu0 0.0
        %354 = vmatpush.msra.mxu0 0.0
        %355 = vmatpush.msra.mxu0 0.0
        %356 = vmatpush.msra.mxu0 0.0
        %357 = vmatpush.msra.mxu0 0.0
        %358 = vmatpush.msra.mxu0 0.0
        %359 = vmatpush.msra.mxu0 0.0
        %360 = vmatpush.msra.mxu0 0.0
        %361 = vmatpush.msra.mxu0 0.0
        %362 = vmatpush.msra.mxu0 0.0
        %363 = vmatpush.msra.mxu0 0.0
        %364 = vmatpush.msra.mxu0 0.0
        %365 = vmatpush.msra.mxu0 0.0
        %366 = vmatpush.msra.mxu0 0.0
        %v367 = vand.u32 %v204, 4294901760
        %368 = vmatpush.msra.mxu0 %v367
        %v369 = vand.u32 %v203, 4294901760
        %370 = vmatpush.msra.mxu0 %v369
        %v371 = vand.u32 %v215, 4294901760
        %372 = vmatmul.f32.gmra.mxu0 %v371
        %v373 = vpop.f32.mrf.mxu0
        %v374 = vadd.f32 %v351, %v373
        %375 = vdwg.mxu0
        %v376 = vmax.f32 %v374, 0.0
        %v377 = vld [vmem:[%s2] sm:$0x3]
        %vm378 = vcmask 15360
        %v380 = vsel %vm378, %v376, 0
        %vm382 = vcmask 1041408
        %v384 = vsel %vm382, %v377, 0
        %386 = vmatpush.msra.mxu0 0.0
        %387 = vmatpush.msra.mxu0 0.0
        %388 = vmatpush.msra.mxu0 0.0
        %389 = vmatpush.msra.mxu0 0.0
        %390 = vmatpush.msra.mxu0 0.0
        %391 = vmatpush.msra.mxu0 0.0
        %392 = vmatpush.msra.mxu0 0.0
        %393 = vmatpush.msra.mxu0 0.0
        %394 = vmatpush.msra.mxu0 0.0
        %395 = vmatpush.msra.mxu0 0.0
        %396 = vmatpush.msra.mxu0 0.0
        %397 = vmatpush.msra.mxu0 0.0
        %398 = vmatpush.msra.mxu0 0.0
        %399 = vmatpush.msra.mxu0 0.0
        %400 = vmatpush.msra.mxu0 0.0
        %v401 = vand.u32 %v384, 4294901760
        %402 = vmatpush.msra.mxu0 %v401
        %v403 = vand.u32 %v380, 4294901760
        %v404 = vsub.f32 %v380, %v403
        %v405 = vand.u32 %v404, 4294901760
        %v406 = vsub.f32 %v404, %v405
        %v407 = vand.u32 %v406, 4294901760
        %408 = vmatmul.f32.gmra.mxu0 %v407
        %v409 = vpop.f32.mrf.mxu0
        %v410 = vadd.f32 0.0, %v409
        %411 = vdwg.mxu0
        %412 = vmatpush.msra.mxu0 0.0
        %413 = vmatpush.msra.mxu0 0.0
        %414 = vmatpush.msra.mxu0 0.0
        %415 = vmatpush.msra.mxu0 0.0
        %416 = vmatpush.msra.mxu0 0.0
        %417 = vmatpush.msra.mxu0 0.0
        %418 = vmatpush.msra.mxu0 0.0
        %419 = vmatpush.msra.mxu0 0.0
        %420 = vmatpush.msra.mxu0 0.0
        %421 = vmatpush.msra.mxu0 0.0
        %422 = vmatpush.msra.mxu0 0.0
        %423 = vmatpush.msra.mxu0 0.0
        %424 = vmatpush.msra.mxu0 0.0
        %425 = vmatpush.msra.mxu0 0.0
        %426 = vmatpush.msra.mxu0 0.0
        %v427 = vand.u32 %v384, 4294901760
        %v428 = vsub.f32 %v384, %v427
        %v429 = vand.u32 %v428, 4294901760
        %v430 = vsub.f32 %v428, %v429
        %v431 = vand.u32 %v430, 4294901760
        %432 = vmatpush.msra.mxu0 %v431
        %v433 = vand.u32 %v380, 4294901760
        %434 = vmatmul.f32.gmra.mxu0 %v433
        %v435 = vpop.f32.mrf.mxu0
        %v436 = vadd.f32 %v410, %v435
        %437 = vdwg.mxu0
        %438 = vmatpush.msra.mxu0 0.0
        %439 = vmatpush.msra.mxu0 0.0
        %440 = vmatpush.msra.mxu0 0.0
        %441 = vmatpush.msra.mxu0 0.0
        %442 = vmatpush.msra.mxu0 0.0
        %443 = vmatpush.msra.mxu0 0.0
        %444 = vmatpush.msra.mxu0 0.0
        %445 = vmatpush.msra.mxu0 0.0
        %446 = vmatpush.msra.mxu0 0.0
        %447 = vmatpush.msra.mxu0 0.0
        %448 = vmatpush.msra.mxu0 0.0
        %449 = vmatpush.msra.mxu0 0.0
        %450 = vmatpush.msra.mxu0 0.0
        %451 = vmatpush.msra.mxu0 0.0
        %452 = vmatpush.msra.mxu0 0.0
        %v453 = vand.u32 %v384, 4294901760
        %v454 = vsub.f32 %v384, %v453
        %455 = vmatpush.msra.mxu0 %v454
        %v456 = vand.u32 %v380, 4294901760
        %v457 = vsub.f32 %v380, %v456
        %458 = vmatmul.f32.gmra.mxu0 %v457
        %v459 = vpop.f32.mrf.mxu0
        %v460 = vadd.f32 %v436, %v459
        %461 = vdwg.mxu0
        %462 = vmatpush.msra.mxu0 0.0
        %463 = vmatpush.msra.mxu0 0.0
        %464 = vmatpush.msra.mxu0 0.0
        %465 = vmatpush.msra.mxu0 0.0
        %466 = vmatpush.msra.mxu0 0.0
        %467 = vmatpush.msra.mxu0 0.0
        %468 = vmatpush.msra.mxu0 0.0
        %469 = vmatpush.msra.mxu0 0.0
        %470 = vmatpush.msra.mxu0 0.0
        %471 = vmatpush.msra.mxu0 0.0
        %472 = vmatpush.msra.mxu0 0.0
        %473 = vmatpush.msra.mxu0 0.0
        %474 = vmatpush.msra.mxu0 0.0
        %475 = vmatpush.msra.mxu0 0.0
        %476 = vmatpush.msra.mxu0 0.0
        %v477 = vand.u32 %v384, 4294901760
        %478 = vmatpush.msra.mxu0 %v477
        %v479 = vand.u32 %v380, 4294901760
        %v480 = vsub.f32 %v380, %v479
        %v481 = vand.u32 %v480, 4294901760
        %482 = vmatmul.f32.gmra.mxu0 %v481
        %v483 = vpop.f32.mrf.mxu0
        %v484 = vadd.f32 %v460, %v483
        %485 = vdwg.mxu0
        %486 = vmatpush.msra.mxu0 0.0
        %487 = vmatpush.msra.mxu0 0.0
        %488 = vmatpush.msra.mxu0 0.0
        %489 = vmatpush.msra.mxu0 0.0
        %490 = vmatpush.msra.mxu0 0.0
        %491 = vmatpush.msra.mxu0 0.0
        %492 = vmatpush.msra.mxu0 0.0
        %493 = vmatpush.msra.mxu0 0.0
        %494 = vmatpush.msra.mxu0 0.0
        %495 = vmatpush.msra.mxu0 0.0
        %496 = vmatpush.msra.mxu0 0.0
        %497 = vmatpush.msra.mxu0 0.0
        %498 = vmatpush.msra.mxu0 0.0
        %499 = vmatpush.msra.mxu0 0.0
        %500 = vmatpush.msra.mxu0 0.0
        %v501 = vand.u32 %v384, 4294901760
        %v502 = vsub.f32 %v384, %v501
        %v503 = vand.u32 %v502, 4294901760
        %504 = vmatpush.msra.mxu0 %v503
        %v505 = vand.u32 %v380, 4294901760
        %506 = vmatmul.f32.gmra.mxu0 %v505
        %v507 = vpop.f32.mrf.mxu0
        %v508 = vadd.f32 %v484, %v507
        %509 = vdwg.mxu0
        %510 = vmatpush.msra.mxu0 0.0
        %511 = vmatpush.msra.mxu0 0.0
        %512 = vmatpush.msra.mxu0 0.0
        %513 = vmatpush.msra.mxu0 0.0
        %514 = vmatpush.msra.mxu0 0.0
        %515 = vmatpush.msra.mxu0 0.0
        %516 = vmatpush.msra.mxu0 0.0
        %517 = vmatpush.msra.mxu0 0.0
        %518 = vmatpush.msra.mxu0 0.0
        %519 = vmatpush.msra.mxu0 0.0
        %520 = vmatpush.msra.mxu0 0.0
        %521 = vmatpush.msra.mxu0 0.0
        %522 = vmatpush.msra.mxu0 0.0
        %523 = vmatpush.msra.mxu0 0.0
        %524 = vmatpush.msra.mxu0 0.0
        %v525 = vand.u32 %v384, 4294901760
        %526 = vmatpush.msra.mxu0 %v525
        %v527 = vand.u32 %v380, 4294901760
        %528 = vmatmul.f32.gmra.mxu0 %v527
        %v529 = vpop.f32.mrf.mxu0
        %v530 = vadd.f32 %v508, %v529
        %531 = vdwg.mxu0
        %v532 = vxor.u32 %v530, 2147483648
        %v533 = vmul.f32 %v532, 1.442695
        %v534 = vpow.pop %v533
        %v535 = vadd.f32 %v534, 1.0
        %v536 = vrcp.pop %v535
        %v537 = vmul.f32 %v535, %v536
        %v538 = vsub.f32 1.0, %v537
        %v539 = vmul.f32 %v536, %v538
        %v540 = vadd.f32 %v536, %v539
        %vm541 = vweird.f32 %v535
        %vm542 = vweird.f32 %v536
        %vm543 = vmor %vm541, %vm542
        %v544 = vsel %vm543, %v536, %v540
        %v545 = vand.u32 2147483647, %v535
        %vm546 = vcmp.eq.f32.partialorder %v545, 8.507059e+37
        %v547 = vand.u32 %v535, 2147483648
        %v548 = vor.u32 1.1754944e-38, %v547
        %v549 = vsel %vm546, %v548, %v544
        %v550 = vmul.f32 1.0, %v549
        %v551 = vperm.slane %v550, 0
        %v552 = vlaneseq
        %v553 = vshrl.u32 %v552, 7
        %555 = vset.pattern.permute.xlu0 %v553
        %556 = vperm.xlu0 %555, %v551
        %v557 = vpop.permute.xlu0 %556
        %v558 = vlaneseq
        %v559 = vshrl.u32 %v558, 7
        %v560 = vadd.s32 %v559, 8
        %561 = vset.pattern.permute.xlu0 %v560
        %562 = vperm.xlu0 %561, %v551
        %v563 = vpop.permute.xlu0 %562
        %v564 = vmul.f32 %v191, %v557
        %v565 = vmul.f32 %v192, %v557
        %v566 = vmul.f32 %v193, %v563
        %v567 = vmul.f32 %v194, %v563
        %568 = vst [vmem:[%s190] sm:$0xff] %v564
        %569 = vst [vmem:[%s190 + $0x8] sm:$0xff] %v565
        %570 = vst [vmem:[%s190 + $0x10] sm:$0xff] %v566
        %571 = vst [vmem:[%s190 + $0x18] sm:$0xff] %v567
        %s572 = sand.u32 %s96, 1
        %s573 = scalar_lea.sflag [#allocation4], %s572
        %s574 = sand.u32 %s96, 1
        %s575 = smul.addr %s574, 32
        %s576 = scalar_lea.vmem [#allocation5], %s575
        // Predicated region
        $region37: #{tpu_custom_call.1} parent=31 // pred_check
          %p577 = pneg %p106
        $region38: #{tpu_custom_call.1} parent=31 // pred_check_branch
          %579 = sbr.rel (%p577) target = $region40
        $region39: #{tpu_custom_call.1} parent=31 // pred_region
          %581 = vsyncadd %s573, 0
          %s582 = smul.addr %s20, 4
          %s583 = smul.addr %s582, 8
          %s584 = scalar_lea.hbm %s3, %s583
          %s585 = sshll.u32 %s576, 4
          %s586 = int_to_ptr.vmem [resolvable:$true] %s585
          %s587 = sshll.u32 %s584, 4
          %s588 = int_to_ptr.hbm [resolvable:$true] %s587
          %593 = dma.vmem_to_hbm [thread:$0]  %s586, 512, %s588, %s573, 256, 256, 16
        $region40: #{tpu_custom_call.1} parent=31 // pred_fallthru
          _
      $region32: #{tpu_custom_call.1} parent=5 // pred_fallthru
        _
      %p594 = scmp.le.s32.totalorder 2, %s15
      // Predicated region
      $region41: #{tpu_custom_call.1} parent=5 // pred_check
        %p595 = pneg %p594
      $region42: #{tpu_custom_call.1} parent=5 // pred_check_branch
        %597 = sbr.rel (%p595) target = $region44
      $region43: #{tpu_custom_call.1} parent=5 // pred_region
        %s598 = ssub.s32 %s15, 2
        // Predicated region
        $region45: #{tpu_custom_call.1} parent=43 // pred_check
          %p599 = pneg %p112
        $region46: #{tpu_custom_call.1} parent=43 // pred_check_branch
          %601 = sbr.rel (%p599) target = $region48
        $region47: #{tpu_custom_call.1} parent=43 // pred_region
          %s602 = sand.u32 %s97, 1
          %s603 = scalar_lea.sflag [#allocation4], %s602
          %s604 = sand.u32 %s97, 1
          %s605 = smul.addr %s604, 32
          %s606 = scalar_lea.vmem [#allocation5], %s605
          %608 = dma.done %s603, 512
        $region48: #{tpu_custom_call.1} parent=43 // pred_fallthru
          _
      $region44: #{tpu_custom_call.1} parent=5 // pred_fallthru
        _
    $region6: #{tpu_custom_call.1} parent=1 // loop_footer
      %s19 = sadd.s32 1, %s15
    $region7: #{tpu_custom_call.1} parent=1 // loop_footer_branch
      %14 = sbr.rel target = $region3
    $region8: #{tpu_custom_call.1} parent=1 // loop_exit
      _
    %609 = vsyncpa [#allocation3], 1
    %s610 = scalar_lea.sflag [#allocation3], 1
    %611 = vsyncpa %s610, 1
    %612 = vsyncpa [#allocation4], 1
    %s613 = scalar_lea.sflag [#allocation4], 1
    %614 = vsyncpa %s613, 1

</llo_original>
